<compile_context>
chip_gen: v6e
topology: v6e:2x2x1
jax: 0.10.0
libtpu: 0.0.40
codegen_flags: <defaults>
</compile_context>

<pallas_src>
import math

import jax
import jax.numpy as jnp
from jax import lax
from jax.experimental import pallas as pl
from jax.experimental.pallas import tpu as pltpu

# ---- config (small, consistent with the module) ----
B = 2          # batch
T = 8          # sequence length (block_size)
C = 32         # n_embd
NH = 4         # n_head
HD = C // NH   # head dim
DROPOUT = 0.0  # eval mode -> attn_dropout / resid_dropout are identity


def _tensorcores_per_chip() -> int:
    """v7x has 2 TensorCores per chip; v5e/v6e have 1.  Default to 1 (safe)."""
    try:
        kind = jax.devices()[0].device_kind.lower()
    except Exception:
        return 1
    return 2 if ("v7" in kind or "7x" in kind) else 1


def _causal_attn_kernel(x_ref, wq_ref, wk_ref, wv_ref, wp_ref, bp_ref,
                        expand_ref, head_mask_ref, attn_mask_ref, collapse_ref,
                        o_ref):
    """One grid step processes `bb` batch elements stacked along sublanes.

    Row layouts (S = bb*T stacked sequence rows, R = bb*NH*T head-stacked rows):
      x / k / v / y / out : row p = b*T + i
      q_bd / scores / att : row r = b*NH*T + h*T + i
    All constant masks are precomputed in the wrapper (hoisted out of the kernel).
    """
    f32 = jnp.float32

    x = x_ref[...]                                                     # (S, CA)
    # q/k/v biases are folded in via the ones column of x; q is pre-scaled by
    # 1/sqrt(HD) (folded into wq in the wrapper).
    q = jnp.dot(x, wq_ref[...], preferred_element_type=f32)           # (S, C)
    k = jnp.dot(x, wk_ref[...], preferred_element_type=f32)           # (S, C)
    v = jnp.dot(x, wv_ref[...], preferred_element_type=f32)           # (S, C)

    head_mask = head_mask_ref[...]                                     # (R, C)

    # Stack all (batch, head, query) rows; keep only that head's embedding cols.
    q_bd = jnp.dot(expand_ref[...], q, preferred_element_type=f32) * head_mask  # (R, C)

    # Scores for ALL batches/heads in one MXU matmul; the additive mask is both
    # causal and cross-batch (-1e30 -> exp underflows to exactly 0 in f32).
    s = lax.dot_general(q_bd, k, (((1,), (1,)), ((), ())),
                        preferred_element_type=f32)                    # (R, S)
    s = s + attn_mask_ref[...]

    # Plain row-wise softmax (each row = one (batch, head, query) pair).
    m = jnp.max(s, axis=-1, keepdims=True)
    p = jnp.exp(s - m)
    att = p / jnp.sum(p, axis=-1, keepdims=True)                       # (R, S)

    # attn @ V, still head-stacked, then collapse heads back to (S, C)
    # (== transpose(1, 2).contiguous().view(T, C) in the PyTorch module).
    y_st = jnp.dot(att, v, preferred_element_type=f32) * head_mask     # (R, C)
    y = jnp.dot(collapse_ref[...], y_st, preferred_element_type=f32)   # (S, C)

    # Output projection written directly as an (S, C) block (masked stores at
    # lane width 32 cost essentially nothing at this size).
    out = jnp.dot(y, wp_ref[...], preferred_element_type=f32) + bp_ref[...]
    # TODO(synk): attn_dropout / resid_dropout are identity at dropout=0 (eval mode).
    o_ref[...] = out.astype(o_ref.dtype)


def causal_self_attention(x, w_attn, b_attn, w_proj, b_proj):
    """x: (B, T, C) float32.  Linear weights stored transposed, i.e. (in, out)."""
    Bx, Tx, Cx = x.shape
    scale = 1.0 / math.sqrt(HD)
    f32 = jnp.float32

    # Grid: one batch per TensorCore on v7x (2 TCs); collapsed to a single step
    # on v5e/v6e (1 TC) so there is no serial-loop / per-step overhead.
    tc = _tensorcores_per_chip()
    G = tc if (tc > 1 and Bx % tc == 0) else 1
    bb = Bx // G                       # batch elements stacked per grid step
    S = bb * Tx                        # stacked sequence rows per step
    R = bb * NH * Tx                   # head-stacked rows per step

    # ---- fold biases into the matmuls: ones column on x, bias row on W_q/k/v.
    # Pad the contraction dim to a multiple of 8 with explicit zeros so no
    # compiler padding ever participates in the contraction.
    CA = Cx + 8
    x_flat = x.reshape(Bx * Tx, Cx).astype(f32)
    x_aug = jnp.concatenate(
        [x_flat, jnp.ones((Bx * Tx, 1), f32), jnp.zeros((Bx * Tx, CA - Cx - 1), f32)],
        axis=1)                                                        # (B*T, CA)

    def _aug_w(w, b):
        return jnp.concatenate(
            [w.astype(f32), b[None, :].astype(f32),
             jnp.zeros((CA - Cx - 1, Cx), f32)], axis=0)               # (CA, C)

    wq = _aug_w(w_attn[:, :Cx] * scale, b_attn[:Cx] * scale)
    wk = _aug_w(w_attn[:, Cx:2 * Cx], b_attn[Cx:2 * Cx])
    wv = _aug_w(w_attn[:, 2 * Cx:], b_attn[2 * Cx:])
    wp = w_proj.astype(f32)
    bp = b_proj.reshape(1, Cx).astype(f32)

    # ---- constant masks (hoisted out of the kernel; fetched once, stay resident)
    r = jnp.arange(R)
    b_r, h_r, i_r = r // (NH * Tx), (r % (NH * Tx)) // Tx, r % Tx
    cS = jnp.arange(S)
    b_c, j_c = cS // Tx, cS % Tx
    cC = jnp.arange(Cx)
    pS = jnp.arange(S)

    # row r of q_bd = q row (b_r*T + i_r)
    expand = ((b_r[:, None] * Tx + i_r[:, None]) == cS[None, :]).astype(f32)     # (R, S)
    # row r keeps only head h_r's embedding columns
    head_mask = (h_r[:, None] == cC[None, :] // HD).astype(f32)                  # (R, C)
    # additive mask: causal within a batch + block cross-batch attention
    attn_mask = jnp.where((b_r[:, None] == b_c[None, :]) &
                          (i_r[:, None] >= j_c[None, :]),
                          f32(0.0), f32(-1e30))                                  # (R, S)
    # y[p, c] = y_st[batch(p)*NH*T + (c//HD)*T + pos(p), c]  (head_mask zeroes the rest)
    collapse = ((pS[:, None] // Tx == b_r[None, :]) &
                (pS[:, None] % Tx == i_r[None, :])).astype(f32)                  # (S, R)

    const = lambda b: (0, 0)
    out_flat = pl.pallas_call(
        _causal_attn_kernel,
        out_shape=jax.ShapeDtypeStruct((Bx * Tx, Cx), x.dtype),
        grid_spec=pltpu.PrefetchScalarGridSpec(
            num_scalar_prefetch=0,
            grid=(G,),
            in_specs=[
                pl.BlockSpec((S, CA), lambda b: (b, 0)),    # x (this step's batches)
                pl.BlockSpec((CA, Cx), const),              # W_q (+bias row, pre-scaled)
                pl.BlockSpec((CA, Cx), const),              # W_k (+bias row)
                pl.BlockSpec((CA, Cx), const),              # W_v (+bias row)
                pl.BlockSpec((Cx, Cx), const),              # W_proj
                pl.BlockSpec((1, Cx), const),               # b_proj
                pl.BlockSpec((R, S), const),                # expand
                pl.BlockSpec((R, Cx), const),               # head_mask
                pl.BlockSpec((R, S), const),                # causal + cross-batch mask
                pl.BlockSpec((S, R), const),                # collapse
            ],
            out_specs=pl.BlockSpec((S, Cx), lambda b: (b, 0)),
        ),
        compiler_params=pltpu.CompilerParams(
            dimension_semantics=("parallel",)),  # v7x: one batch per TensorCore
    )(x_aug, wq, wk, wv, wp, bp, expand, head_mask, attn_mask, collapse)

    return out_flat.reshape(Bx, Tx, Cx)


def _reference(x, w_attn, b_attn, w_proj, b_proj):
    """Pure-JAX reference mirroring the PyTorch forward (dropout=0)."""
    Bx, Tx, Cx = x.shape
    qkv = x @ w_attn + b_attn
    q, k, v = jnp.split(qkv, 3, axis=2)
    q = q.reshape(Bx, Tx, NH, HD).transpose(0, 2, 1, 3)
    k = k.reshape(Bx, Tx, NH, HD).transpose(0, 2, 1, 3)
    v = v.reshape(Bx, Tx, NH, HD).transpose(0, 2, 1, 3)
    att = jnp.einsum("bhqd,bhkd->bhqk", q, k) / math.sqrt(HD)
    mask = jnp.tril(jnp.ones((Tx, Tx), bool))
    att = jnp.where(mask[None, None], att, -jnp.inf)
    att = jax.nn.softmax(att, axis=-1)
    y = jnp.einsum("bhqk,bhkd->bhqd", att, v)
    y = y.transpose(0, 2, 1, 3).reshape(Bx, Tx, Cx)
    return y @ w_proj + b_proj


if __name__ == "__main__":
    key = jax.random.PRNGKey(0)
    kx, k1, k2, k3, k4 = jax.random.split(key, 5)

    x = jax.random.normal(kx, (B, T, C), dtype=jnp.float32)

    # nn.Linear(C, 3C): weight (3C, C), bias (3C,)  -> stored transposed (C, 3C)
    w_attn = jax.random.normal(k1, (C, 3 * C), dtype=jnp.float32) * 0.02
    b_attn = jax.random.normal(k2, (3 * C,), dtype=jnp.float32) * 0.02
    # nn.Linear(C, C): weight (C, C), bias (C,)     -> stored transposed (C, C)
    w_proj = jax.random.normal(k3, (C, C), dtype=jnp.float32) * 0.02
    b_proj = jax.random.normal(k4, (C,), dtype=jnp.float32) * 0.02

    out = causal_self_attention(x, w_attn, b_attn, w_proj, b_proj)
    out = jax.block_until_ready(out)

    ref = _reference(x, w_attn, b_attn, w_proj, b_proj)
    assert out.shape == (B, T, C)
    # small slack for the folded 1/sqrt(HD) scale's different rounding order
    assert jnp.allclose(out, ref, atol=1e-3, rtol=1e-3), "mismatch vs JAX reference"

    print("KERNEL_OK")
</pallas_src>

<mosaic_0001>
module attributes {stable_mosaic.version = 11 : i64} {
  func.func @_causal_attn_kernel(%arg0: i32, %arg1: memref<16x40xf32, #tpu.memory_space<vmem>>, %arg2: memref<40x32xf32, #tpu.memory_space<vmem>>, %arg3: memref<40x32xf32, #tpu.memory_space<vmem>>, %arg4: memref<40x32xf32, #tpu.memory_space<vmem>>, %arg5: memref<32x32xf32, #tpu.memory_space<vmem>>, %arg6: memref<1x32xf32, #tpu.memory_space<vmem>>, %arg7: memref<64x16xf32, #tpu.memory_space<vmem>>, %arg8: memref<64x32xf32, #tpu.memory_space<vmem>>, %arg9: memref<64x16xf32, #tpu.memory_space<vmem>>, %arg10: memref<16x64xf32, #tpu.memory_space<vmem>>, %arg11: memref<16x32xf32, #tpu.memory_space<vmem>>) attributes {dimension_semantics = [#tpu.dimension_semantics<parallel>], iteration_bounds = array<i64: 1>, scalar_prefetch = 0 : i64, scratch_operands = 0 : i64, tpu.core_type = #tpu.core_type<tc>, window_params = [{transform_indices = @transform_0, window_bounds = array<i64: 16, 40>}, {pipeline_mode = #tpu.pipeline_mode<synchronous>, transform_indices = @transform_1, window_bounds = array<i64: 40, 32>}, {pipeline_mode = #tpu.pipeline_mode<synchronous>, transform_indices = @transform_2, window_bounds = array<i64: 40, 32>}, {pipeline_mode = #tpu.pipeline_mode<synchronous>, transform_indices = @transform_3, window_bounds = array<i64: 40, 32>}, {pipeline_mode = #tpu.pipeline_mode<synchronous>, transform_indices = @transform_4, window_bounds = array<i64: 32, 32>}, {pipeline_mode = #tpu.pipeline_mode<synchronous>, transform_indices = @transform_5, window_bounds = array<i64: 1, 32>}, {pipeline_mode = #tpu.pipeline_mode<synchronous>, transform_indices = @transform_6, window_bounds = array<i64: 64, 16>}, {pipeline_mode = #tpu.pipeline_mode<synchronous>, transform_indices = @transform_7, window_bounds = array<i64: 64, 32>}, {pipeline_mode = #tpu.pipeline_mode<synchronous>, transform_indices = @transform_8, window_bounds = array<i64: 64, 16>}, {pipeline_mode = #tpu.pipeline_mode<synchronous>, transform_indices = @transform_9, window_bounds = array<i64: 16, 64>}, {transform_indices = @transform_10, window_bounds = array<i64: 16, 32>}]} {
    %c0 = arith.constant 0 : index
    %c0_0 = arith.constant 0 : index
    %0 = vector.load %arg1[%c0, %c0_0] : memref<16x40xf32, #tpu.memory_space<vmem>>, vector<16x40xf32>
    %c0_1 = arith.constant 0 : index
    %c0_2 = arith.constant 0 : index
    %1 = vector.load %arg2[%c0_1, %c0_2] : memref<40x32xf32, #tpu.memory_space<vmem>>, vector<40x32xf32>
    %cst = arith.constant dense<0.000000e+00> : vector<16x32xf32>
    %2 = tpu.matmul %0, %1, %cst {dimension_numbers = #tpu.dot_dimension_numbers<[1], [0], [0], [1], [0, 0, 1, 1], [], []>} : vector<16x40xf32>, vector<40x32xf32>, vector<16x32xf32> -> vector<16x32xf32>
    %c0_3 = arith.constant 0 : index
    %c0_4 = arith.constant 0 : index
    %3 = vector.load %arg3[%c0_3, %c0_4] : memref<40x32xf32, #tpu.memory_space<vmem>>, vector<40x32xf32>
    %cst_5 = arith.constant dense<0.000000e+00> : vector<16x32xf32>
    %4 = tpu.matmul %0, %3, %cst_5 {dimension_numbers = #tpu.dot_dimension_numbers<[1], [0], [0], [1], [0, 0, 1, 1], [], []>} : vector<16x40xf32>, vector<40x32xf32>, vector<16x32xf32> -> vector<16x32xf32>
    %c0_6 = arith.constant 0 : index
    %c0_7 = arith.constant 0 : index
    %5 = vector.load %arg4[%c0_6, %c0_7] : memref<40x32xf32, #tpu.memory_space<vmem>>, vector<40x32xf32>
    %cst_8 = arith.constant dense<0.000000e+00> : vector<16x32xf32>
    %6 = tpu.matmul %0, %5, %cst_8 {dimension_numbers = #tpu.dot_dimension_numbers<[1], [0], [0], [1], [0, 0, 1, 1], [], []>} : vector<16x40xf32>, vector<40x32xf32>, vector<16x32xf32> -> vector<16x32xf32>
    %c0_9 = arith.constant 0 : index
    %c0_10 = arith.constant 0 : index
    %7 = vector.load %arg8[%c0_9, %c0_10] : memref<64x32xf32, #tpu.memory_space<vmem>>, vector<64x32xf32>
    %c0_11 = arith.constant 0 : index
    %c0_12 = arith.constant 0 : index
    %8 = vector.load %arg7[%c0_11, %c0_12] : memref<64x16xf32, #tpu.memory_space<vmem>>, vector<64x16xf32>
    %cst_13 = arith.constant dense<0.000000e+00> : vector<64x32xf32>
    %9 = tpu.matmul %8, %2, %cst_13 {dimension_numbers = #tpu.dot_dimension_numbers<[1], [0], [0], [1], [0, 0, 1, 1], [], []>} : vector<64x16xf32>, vector<16x32xf32>, vector<64x32xf32> -> vector<64x32xf32>
    %10 = arith.mulf %9, %7 : vector<64x32xf32>
    %cst_14 = arith.constant dense<0.000000e+00> : vector<64x16xf32>
    %11 = tpu.matmul %10, %4, %cst_14 {dimension_numbers = #tpu.dot_dimension_numbers<[1], [1], [0], [0], [0, 0, 1, 0], [], []>} : vector<64x32xf32>, vector<16x32xf32>, vector<64x16xf32> -> vector<64x16xf32>
    %c0_15 = arith.constant 0 : index
    %c0_16 = arith.constant 0 : index
    %12 = vector.load %arg9[%c0_15, %c0_16] : memref<64x16xf32, #tpu.memory_space<vmem>>, vector<64x16xf32>
    %13 = arith.addf %11, %12 : vector<64x16xf32>
    %cst_17 = arith.constant dense<0xFF800000> : vector<64xf32>
    %14 = vector.multi_reduction <maximumf>, %13, %cst_17 [1] : vector<64x16xf32> to vector<64xf32>
    %15 = vector.shape_cast %14 : vector<64xf32> to vector<64x1xf32>
    %16 = vector.broadcast %15 : vector<64x1xf32> to vector<64x16xf32>
    %17 = arith.subf %13, %16 : vector<64x16xf32>
    %18 = math.exp %17 : vector<64x16xf32>
    %cst_18 = arith.constant dense<0.000000e+00> : vector<64xf32>
    %19 = vector.multi_reduction <add>, %18, %cst_18 [1] : vector<64x16xf32> to vector<64xf32>
    %20 = vector.shape_cast %19 : vector<64xf32> to vector<64x1xf32>
    %21 = vector.broadcast %20 : vector<64x1xf32> to vector<64x16xf32>
    %22 = arith.divf %18, %21 : vector<64x16xf32>
    %cst_19 = arith.constant dense<0.000000e+00> : vector<64x32xf32>
    %23 = tpu.matmul %22, %6, %cst_19 {dimension_numbers = #tpu.dot_dimension_numbers<[1], [0], [0], [1], [0, 0, 1, 1], [], []>} : vector<64x16xf32>, vector<16x32xf32>, vector<64x32xf32> -> vector<64x32xf32>
    %24 = arith.mulf %23, %7 : vector<64x32xf32>
    %c0_20 = arith.constant 0 : index
    %c0_21 = arith.constant 0 : index
    %25 = vector.load %arg10[%c0_20, %c0_21] : memref<16x64xf32, #tpu.memory_space<vmem>>, vector<16x64xf32>
    %cst_22 = arith.constant dense<0.000000e+00> : vector<16x32xf32>
    %26 = tpu.matmul %25, %24, %cst_22 {dimension_numbers = #tpu.dot_dimension_numbers<[1], [0], [0], [1], [0, 0, 1, 1], [], []>} : vector<16x64xf32>, vector<64x32xf32>, vector<16x32xf32> -> vector<16x32xf32>
    %c0_23 = arith.constant 0 : index
    %c0_24 = arith.constant 0 : index
    %27 = vector.load %arg5[%c0_23, %c0_24] : memref<32x32xf32, #tpu.memory_space<vmem>>, vector<32x32xf32>
    %cst_25 = arith.constant dense<0.000000e+00> : vector<16x32xf32>
    %28 = tpu.matmul %26, %27, %cst_25 {dimension_numbers = #tpu.dot_dimension_numbers<[1], [0], [0], [1], [0, 0, 1, 1], [], []>} : vector<16x32xf32>, vector<32x32xf32>, vector<16x32xf32> -> vector<16x32xf32>
    %c0_26 = arith.constant 0 : index
    %c0_27 = arith.constant 0 : index
    %29 = vector.load %arg6[%c0_26, %c0_27] : memref<1x32xf32, #tpu.memory_space<vmem>>, vector<1x32xf32>
    %30 = vector.broadcast %29 : vector<1x32xf32> to vector<16x32xf32>
    %31 = arith.addf %28, %30 : vector<16x32xf32>
    %c0_28 = arith.constant 0 : index
    %c0_29 = arith.constant 0 : index
    %32 = vector.load %arg11[%c0_28, %c0_29] : memref<16x32xf32, #tpu.memory_space<vmem>>, vector<16x32xf32>
    tpu.vector_store %arg11[%c0_28, %c0_29], %31 {strides = array<i32>} : memref<16x32xf32, #tpu.memory_space<vmem>>, vector<16x32xf32>,
    return
  }
  func.func @transform_0(%arg0: i32) -> (i32, i32) {
    %c0_i32 = arith.constant 0 : i32
    %c0_i32_0 = arith.constant 0 : i32
    return %arg0, %c0_i32 : i32, i32
  }
  func.func @transform_1(%arg0: i32) -> (i32, i32) {
    %c0_i32 = arith.constant 0 : i32
    %c0_i32_0 = arith.constant 0 : i32
    %c0_i32_1 = arith.constant 0 : i32
    return %c0_i32, %c0_i32_0 : i32, i32
  }
  func.func @transform_2(%arg0: i32) -> (i32, i32) {
    %c0_i32 = arith.constant 0 : i32
    %c0_i32_0 = arith.constant 0 : i32
    %c0_i32_1 = arith.constant 0 : i32
    return %c0_i32, %c0_i32_0 : i32, i32
  }
  func.func @transform_3(%arg0: i32) -> (i32, i32) {
    %c0_i32 = arith.constant 0 : i32
    %c0_i32_0 = arith.constant 0 : i32
    %c0_i32_1 = arith.constant 0 : i32
    return %c0_i32, %c0_i32_0 : i32, i32
  }
  func.func @transform_4(%arg0: i32) -> (i32, i32) {
    %c0_i32 = arith.constant 0 : i32
    %c0_i32_0 = arith.constant 0 : i32
    %c0_i32_1 = arith.constant 0 : i32
    return %c0_i32, %c0_i32_0 : i32, i32
  }
  func.func @transform_5(%arg0: i32) -> (i32, i32) {
    %c0_i32 = arith.constant 0 : i32
    %c0_i32_0 = arith.constant 0 : i32
    %c0_i32_1 = arith.constant 0 : i32
    return %c0_i32, %c0_i32_0 : i32, i32
  }
  func.func @transform_6(%arg0: i32) -> (i32, i32) {
    %c0_i32 = arith.constant 0 : i32
    %c0_i32_0 = arith.constant 0 : i32
    %c0_i32_1 = arith.constant 0 : i32
    return %c0_i32, %c0_i32_0 : i32, i32
  }
  func.func @transform_7(%arg0: i32) -> (i32, i32) {
    %c0_i32 = arith.constant 0 : i32
    %c0_i32_0 = arith.constant 0 : i32
    %c0_i32_1 = arith.constant 0 : i32
    return %c0_i32, %c0_i32_0 : i32, i32
  }
  func.func @transform_8(%arg0: i32) -> (i32, i32) {
    %c0_i32 = arith.constant 0 : i32
    %c0_i32_0 = arith.constant 0 : i32
    %c0_i32_1 = arith.constant 0 : i32
    return %c0_i32, %c0_i32_0 : i32, i32
  }
  func.func @transform_9(%arg0: i32) -> (i32, i32) {
    %c0_i32 = arith.constant 0 : i32
    %c0_i32_0 = arith.constant 0 : i32
    %c0_i32_1 = arith.constant 0 : i32
    return %c0_i32, %c0_i32_0 : i32, i32
  }
  func.func @transform_10(%arg0: i32) -> (i32, i32) {
    %c0_i32 = arith.constant 0 : i32
    %c0_i32_0 = arith.constant 0 : i32
    return %arg0, %c0_i32 : i32, i32
  }
}

</mosaic_0001>

<llo_original>
// kernel: tpu_custom_call.1
$region0: #{tpu_custom_call.1}
  #allocation0 [shape = 'u32[]', space=smem, size = 0x4, offset = 0x4, fixed_abs, tag = 'smem constant byte address 0x4 - core index']
  #allocation1 [shape = 'u32[144,128]{1,0:T(1,128)}', space=vmem, size = 0x12000, scoped, tag = 'internal scratch']
  %s0 = inlined_call_operand.vmem [shape: f32[16,40], index: 0, kind: input, shape index: {}]
  %s1 = inlined_call_operand.vmem [shape: f32[40,32], index: 1, kind: input, shape index: {}]
  %s2 = inlined_call_operand.vmem [shape: f32[40,32], index: 2, kind: input, shape index: {}]
  %s3 = inlined_call_operand.vmem [shape: f32[40,32], index: 3, kind: input, shape index: {}]
  %s4 = inlined_call_operand.vmem [shape: f32[32,32], index: 4, kind: input, shape index: {}]
  %s5 = inlined_call_operand.vmem [shape: f32[1,32], index: 5, kind: input, shape index: {}]
  %s6 = inlined_call_operand.vmem [shape: f32[64,16], index: 6, kind: input, shape index: {}]
  %s7 = inlined_call_operand.vmem [shape: f32[64,32], index: 7, kind: input, shape index: {}]
  %s8 = inlined_call_operand.vmem [shape: f32[64,16], index: 8, kind: input, shape index: {}]
  %s9 = inlined_call_operand.vmem [shape: f32[16,64], index: 9, kind: input, shape index: {}]
  %s10 = inlined_call_operand.hbm [shape: f32[16,32], index: 10, kind: output, shape index: {}]
  %s11 = sld [smem:[#allocation0]]
  $region50: #{tpu_custom_call.1} parent=0
    _
  %s13 = ssub.s32 1, %s11
  %s14 = scalar_select 0, %s13, %s11
  $region1: #{tpu_custom_call.1} parent=0
    #allocation2 [shape = 'u8[8192]{0}', space=vmem, size = 0x2000, scoped, tag = 'output window, operand 0, single buffered']
    #allocation3 [shape = 's32[1]{0}', space=sflag, size = 0x4, scoped, tag = 'scoped memory for tpu_custom_call.1']
    %15 = vsyncpa [#allocation3], 0
    // Predicated region
    $region2: #{tpu_custom_call.1} parent=1 // pred_check
      _
    $region3: #{tpu_custom_call.1} parent=1 // pred_check_branch
      %17 = sbr.rel (0) target = $region5
    $region4: #{tpu_custom_call.1} parent=1 // pred_region
      _
    $region5: #{tpu_custom_call.1} parent=1 // pred_fallthru
      _
    // Predicated region
    $region6: #{tpu_custom_call.1} parent=1 // pred_check
      _
    $region7: #{tpu_custom_call.1} parent=1 // pred_check_branch
      %19 = sbr.rel (0) target = $region9
    $region8: #{tpu_custom_call.1} parent=1 // pred_region
      _
    $region9: #{tpu_custom_call.1} parent=1 // pred_fallthru
      _
    // Predicated region
    $region10: #{tpu_custom_call.1} parent=1 // pred_check
      _
    $region11: #{tpu_custom_call.1} parent=1 // pred_check_branch
      %21 = sbr.rel (0) target = $region13
    $region12: #{tpu_custom_call.1} parent=1 // pred_region
      _
    $region13: #{tpu_custom_call.1} parent=1 // pred_fallthru
      _
    // Predicated region
    $region14: #{tpu_custom_call.1} parent=1 // pred_check
      _
    $region15: #{tpu_custom_call.1} parent=1 // pred_check_branch
      %23 = sbr.rel (0) target = $region17
    $region16: #{tpu_custom_call.1} parent=1 // pred_region
      _
    $region17: #{tpu_custom_call.1} parent=1 // pred_fallthru
      _
    // Predicated region
    $region18: #{tpu_custom_call.1} parent=1 // pred_check
      _
    $region19: #{tpu_custom_call.1} parent=1 // pred_check_branch
      %25 = sbr.rel (0) target = $region21
    $region20: #{tpu_custom_call.1} parent=1 // pred_region
      _
    $region21: #{tpu_custom_call.1} parent=1 // pred_fallthru
      _
    // Predicated region
    $region22: #{tpu_custom_call.1} parent=1 // pred_check
      _
    $region23: #{tpu_custom_call.1} parent=1 // pred_check_branch
      %27 = sbr.rel (0) target = $region25
    $region24: #{tpu_custom_call.1} parent=1 // pred_region
      _
    $region25: #{tpu_custom_call.1} parent=1 // pred_fallthru
      _
    // Predicated region
    $region26: #{tpu_custom_call.1} parent=1 // pred_check
      _
    $region27: #{tpu_custom_call.1} parent=1 // pred_check_branch
      %29 = sbr.rel (0) target = $region29
    $region28: #{tpu_custom_call.1} parent=1 // pred_region
      _
    $region29: #{tpu_custom_call.1} parent=1 // pred_fallthru
      _
    // Predicated region
    $region30: #{tpu_custom_call.1} parent=1 // pred_check
      _
    $region31: #{tpu_custom_call.1} parent=1 // pred_check_branch
      %31 = sbr.rel (0) target = $region33
    $region32: #{tpu_custom_call.1} parent=1 // pred_region
      _
    $region33: #{tpu_custom_call.1} parent=1 // pred_fallthru
      _
    // Predicated region
    $region34: #{tpu_custom_call.1} parent=1 // pred_check
      _
    $region35: #{tpu_custom_call.1} parent=1 // pred_check_branch
      %33 = sbr.rel (0) target = $region37
    $region36: #{tpu_custom_call.1} parent=1 // pred_region
      _
    $region37: #{tpu_custom_call.1} parent=1 // pred_fallthru
      _
    // Predicated region
    $region38: #{tpu_custom_call.1} parent=1 // pred_check
      _
    $region39: #{tpu_custom_call.1} parent=1 // pred_check_branch
      %35 = sbr.rel (0) target = $region41
    $region40: #{tpu_custom_call.1} parent=1 // pred_region
      _
    $region41: #{tpu_custom_call.1} parent=1 // pred_fallthru
      _
    %v36 = vld [vmem:[%s0] sm:$0xff]
    %v37 = vld [vmem:[%s0 + $0x8] sm:$0xff]
    %v38 = vld [vmem:[%s1] sm:$0xff]
    %v39 = vld [vmem:[%s1 + $0x8] sm:$0xff]
    %v40 = vld [vmem:[%s1 + $0x10] sm:$0xff]
    %v41 = vld [vmem:[%s1 + $0x18] sm:$0xff]
    %v42 = vld [vmem:[%s1 + $0x20] sm:$0xff]
    %vm43 = vcmask 326656
    %v45 = vsel %vm43, %v36, 0
    %v48 = vsel %vm43, %v37, 0
    %50 = vmatprep.subr.mxu0 0.0
    %51 = vmatpush1.msra.mxu0 0.0
    %52 = vmatprep.subr.mxu0 0.0
    %53 = vmatpush1.msra.mxu0 0.0
    %54 = vmatprep.subr.mxu0 0.0
    %55 = vmatpush1.msra.mxu0 0.0
    %56 = vmatprep.subr.mxu0 0.0
    %57 = vmatpush1.msra.mxu0 0.0
    %58 = vmatprep.subr.mxu0 0.0
    %59 = vmatpush1.msra.mxu0 0.0
    %60 = vmatprep.subr.mxu0 0.0
    %61 = vmatpush1.msra.mxu0 0.0
    %62 = vmatprep.subr.mxu0 0.0
    %63 = vmatpush1.msra.mxu0 0.0
    %64 = vmatprep.subr.mxu0 0.0
    %65 = vmatpush1.msra.mxu0 0.0
    %66 = vmatprep.subr.mxu0 0.0
    %67 = vmatpush1.msra.mxu0 0.0
    %68 = vmatprep.subr.mxu0 0.0
    %69 = vmatpush1.msra.mxu0 0.0
    %70 = vmatprep.subr.mxu0 0.0
    %71 = vmatpush1.msra.mxu0 0.0
    %72 = vmatprep.subr.mxu0 0.0
    %73 = vmatpush1.msra.mxu0 %v42
    %74 = vmatprep.subr.mxu0 0.0
    %75 = vmatpush1.msra.mxu0 %v41
    %76 = vmatprep.subr.mxu0 0.0
    %77 = vmatpush1.msra.mxu0 %v40
    %78 = vmatprep.subr.mxu0 0.0
    %79 = vmatpush1.msra.mxu0 %v39
    %80 = vmatprep.subr.mxu0 0.0
    %81 = vmatpush1.msra.mxu0 %v38
    %82 = vmatprep.subr.mxu0 0.0
    %83 = vmatpush2.msra.mxu0 0.0
    %84 = vmatprep.subr.mxu0 0.0
    %85 = vmatpush2.msra.mxu0 0.0
    %86 = vmatprep.subr.mxu0 0.0
    %87 = vmatpush2.msra.mxu0 0.0
    %88 = vmatprep.subr.mxu0 0.0
    %89 = vmatpush2.msra.mxu0 0.0
    %90 = vmatprep.subr.mxu0 0.0
    %91 = vmatpush2.msra.mxu0 0.0
    %92 = vmatprep.subr.mxu0 0.0
    %93 = vmatpush2.msra.mxu0 0.0
    %94 = vmatprep.subr.mxu0 0.0
    %95 = vmatpush2.msra.mxu0 0.0
    %96 = vmatprep.subr.mxu0 0.0
    %97 = vmatpush2.msra.mxu0 0.0
    %98 = vmatprep.subr.mxu0 0.0
    %99 = vmatpush2.msra.mxu0 0.0
    %100 = vmatprep.subr.mxu0 0.0
    %101 = vmatpush2.msra.mxu0 0.0
    %102 = vmatprep.subr.mxu0 0.0
    %103 = vmatpush2.msra.mxu0 0.0
    %104 = vmatprep.subr.mxu0 0.0
    %105 = vmatpush2.msra.mxu0 0.0
    %106 = vmatprep.subr.mxu0 0.0
    %107 = vmatpush2.msra.mxu0 0.0
    %108 = vmatprep.subr.mxu0 0.0
    %109 = vmatpush2.msra.mxu0 0.0
    %110 = vmatprep.subr.mxu0 0.0
    %111 = vmatpush2.msra.mxu0 0.0
    %112 = vmatprep.subr.mxu0 0.0
    %113 = vmatpush2.msra.mxu0 0.0
    %114 = vmatprep.mubr.f32.mxu0 0.0
    %115 = vmatmul.mubr.f32.gmra.mxu0 %v45
    %v116 = vpop.f32.mrf.mxu0
    %v117 = vadd.f32 0.0, %v116
    %v118 = vpop.f32.mrf.mxu0
    %119 = vmatprep.mubr.f32.mxu0 0.0
    %120 = vmatmul.mubr.f32.gmra.mxu0 %v48
    %v121 = vpop.f32.mrf.mxu0
    %v122 = vadd.f32 0.0, %v121
    %v123 = vpop.f32.mrf.mxu0
    %124 = vdwg.mxu0
    %v125 = vld [vmem:[%s2] sm:$0xff]
    %v126 = vld [vmem:[%s2 + $0x8] sm:$0xff]
    %v127 = vld [vmem:[%s2 + $0x10] sm:$0xff]
    %v128 = vld [vmem:[%s2 + $0x18] sm:$0xff]
    %v129 = vld [vmem:[%s2 + $0x20] sm:$0xff]
    %130 = vmatprep.subr.mxu0 0.0
    %131 = vmatpush1.msra.mxu0 0.0
    %132 = vmatprep.subr.mxu0 0.0
    %133 = vmatpush1.msra.mxu0 0.0
    %134 = vmatprep.subr.mxu0 0.0
    %135 = vmatpush1.msra.mxu0 0.0
    %136 = vmatprep.subr.mxu0 0.0
    %137 = vmatpush1.msra.mxu0 0.0
    %138 = vmatprep.subr.mxu0 0.0
    %139 = vmatpush1.msra.mxu0 0.0
    %140 = vmatprep.subr.mxu0 0.0
    %141 = vmatpush1.msra.mxu0 0.0
    %142 = vmatprep.subr.mxu0 0.0
    %143 = vmatpush1.msra.mxu0 0.0
    %144 = vmatprep.subr.mxu0 0.0
    %145 = vmatpush1.msra.mxu0 0.0
    %146 = vmatprep.subr.mxu0 0.0
    %147 = vmatpush1.msra.mxu0 0.0
    %148 = vmatprep.subr.mxu0 0.0
    %149 = vmatpush1.msra.mxu0 0.0
    %150 = vmatprep.subr.mxu0 0.0
    %151 = vmatpush1.msra.mxu0 0.0
    %152 = vmatprep.subr.mxu0 0.0
    %153 = vmatpush1.msra.mxu0 %v129
    %154 = vmatprep.subr.mxu0 0.0
    %155 = vmatpush1.msra.mxu0 %v128
    %156 = vmatprep.subr.mxu0 0.0
    %157 = vmatpush1.msra.mxu0 %v127
    %158 = vmatprep.subr.mxu0 0.0
    %159 = vmatpush1.msra.mxu0 %v126
    %160 = vmatprep.subr.mxu0 0.0
    %161 = vmatpush1.msra.mxu0 %v125
    %162 = vmatprep.subr.mxu0 0.0
    %163 = vmatpush2.msra.mxu0 0.0
    %164 = vmatprep.subr.mxu0 0.0
    %165 = vmatpush2.msra.mxu0 0.0
    %166 = vmatprep.subr.mxu0 0.0
    %167 = vmatpush2.msra.mxu0 0.0
    %168 = vmatprep.subr.mxu0 0.0
    %169 = vmatpush2.msra.mxu0 0.0
    %170 = vmatprep.subr.mxu0 0.0
    %171 = vmatpush2.msra.mxu0 0.0
    %172 = vmatprep.subr.mxu0 0.0
    %173 = vmatpush2.msra.mxu0 0.0
    %174 = vmatprep.subr.mxu0 0.0
    %175 = vmatpush2.msra.mxu0 0.0
    %176 = vmatprep.subr.mxu0 0.0
    %177 = vmatpush2.msra.mxu0 0.0
    %178 = vmatprep.subr.mxu0 0.0
    %179 = vmatpush2.msra.mxu0 0.0
    %180 = vmatprep.subr.mxu0 0.0
    %181 = vmatpush2.msra.mxu0 0.0
    %182 = vmatprep.subr.mxu0 0.0
    %183 = vmatpush2.msra.mxu0 0.0
    %184 = vmatprep.subr.mxu0 0.0
    %185 = vmatpush2.msra.mxu0 0.0
    %186 = vmatprep.subr.mxu0 0.0
    %187 = vmatpush2.msra.mxu0 0.0
    %188 = vmatprep.subr.mxu0 0.0
    %189 = vmatpush2.msra.mxu0 0.0
    %190 = vmatprep.subr.mxu0 0.0
    %191 = vmatpush2.msra.mxu0 0.0
    %192 = vmatprep.subr.mxu0 0.0
    %193 = vmatpush2.msra.mxu0 0.0
    %194 = vmatprep.mubr.f32.mxu0 0.0
    %195 = vmatmul.mubr.f32.gmra.mxu0 %v45
    %v196 = vpop.f32.mrf.mxu0
    %v197 = vadd.f32 0.0, %v196
    %v198 = vpop.f32.mrf.mxu0
    %199 = vmatprep.mubr.f32.mxu0 0.0
    %200 = vmatmul.mubr.f32.gmra.mxu0 %v48
    %v201 = vpop.f32.mrf.mxu0
    %v202 = vadd.f32 0.0, %v201
    %v203 = vpop.f32.mrf.mxu0
    %204 = vdwg.mxu0
    %v205 = vld [vmem:[%s3] sm:$0xff]
    %v206 = vld [vmem:[%s3 + $0x8] sm:$0xff]
    %v207 = vld [vmem:[%s3 + $0x10] sm:$0xff]
    %v208 = vld [vmem:[%s3 + $0x18] sm:$0xff]
    %v209 = vld [vmem:[%s3 + $0x20] sm:$0xff]
    %210 = vmatprep.subr.mxu0 0.0
    %211 = vmatpush1.msra.mxu0 0.0
    %212 = vmatprep.subr.mxu0 0.0
    %213 = vmatpush1.msra.mxu0 0.0
    %214 = vmatprep.subr.mxu0 0.0
    %215 = vmatpush1.msra.mxu0 0.0
    %216 = vmatprep.subr.mxu0 0.0
    %217 = vmatpush1.msra.mxu0 0.0
    %218 = vmatprep.subr.mxu0 0.0
    %219 = vmatpush1.msra.mxu0 0.0
    %220 = vmatprep.subr.mxu0 0.0
    %221 = vmatpush1.msra.mxu0 0.0
    %222 = vmatprep.subr.mxu0 0.0
    %223 = vmatpush1.msra.mxu0 0.0
    %224 = vmatprep.subr.mxu0 0.0
    %225 = vmatpush1.msra.mxu0 0.0
    %226 = vmatprep.subr.mxu0 0.0
    %227 = vmatpush1.msra.mxu0 0.0
    %228 = vmatprep.subr.mxu0 0.0
    %229 = vmatpush1.msra.mxu0 0.0
    %230 = vmatprep.subr.mxu0 0.0
    %231 = vmatpush1.msra.mxu0 0.0
    %232 = vmatprep.subr.mxu0 0.0
    %233 = vmatpush1.msra.mxu0 %v209
    %234 = vmatprep.subr.mxu0 0.0
    %235 = vmatpush1.msra.mxu0 %v208
    %236 = vmatprep.subr.mxu0 0.0
    %237 = vmatpush1.msra.mxu0 %v207
    %238 = vmatprep.subr.mxu0 0.0
    %239 = vmatpush1.msra.mxu0 %v206
    %240 = vmatprep.subr.mxu0 0.0
    %241 = vmatpush1.msra.mxu0 %v205
    %242 = vmatprep.subr.mxu0 0.0
    %243 = vmatpush2.msra.mxu0 0.0
    %244 = vmatprep.subr.mxu0 0.0
    %245 = vmatpush2.msra.mxu0 0.0
    %246 = vmatprep.subr.mxu0 0.0
    %247 = vmatpush2.msra.mxu0 0.0
    %248 = vmatprep.subr.mxu0 0.0
    %249 = vmatpush2.msra.mxu0 0.0
    %250 = vmatprep.subr.mxu0 0.0
    %251 = vmatpush2.msra.mxu0 0.0
    %252 = vmatprep.subr.mxu0 0.0
    %253 = vmatpush2.msra.mxu0 0.0
    %254 = vmatprep.subr.mxu0 0.0
    %255 = vmatpush2.msra.mxu0 0.0
    %256 = vmatprep.subr.mxu0 0.0
    %257 = vmatpush2.msra.mxu0 0.0
    %258 = vmatprep.subr.mxu0 0.0
    %259 = vmatpush2.msra.mxu0 0.0
    %260 = vmatprep.subr.mxu0 0.0
    %261 = vmatpush2.msra.mxu0 0.0
    %262 = vmatprep.subr.mxu0 0.0
    %263 = vmatpush2.msra.mxu0 0.0
    %264 = vmatprep.subr.mxu0 0.0
    %265 = vmatpush2.msra.mxu0 0.0
    %266 = vmatprep.subr.mxu0 0.0
    %267 = vmatpush2.msra.mxu0 0.0
    %268 = vmatprep.subr.mxu0 0.0
    %269 = vmatpush2.msra.mxu0 0.0
    %270 = vmatprep.subr.mxu0 0.0
    %271 = vmatpush2.msra.mxu0 0.0
    %272 = vmatprep.subr.mxu0 0.0
    %273 = vmatpush2.msra.mxu0 0.0
    %274 = vmatprep.mubr.f32.mxu0 0.0
    %275 = vmatmul.mubr.f32.gmra.mxu0 %v45
    %v276 = vpop.f32.mrf.mxu0
    %v277 = vadd.f32 0.0, %v276
    %v278 = vpop.f32.mrf.mxu0
    %279 = vmatprep.mubr.f32.mxu0 0.0
    %280 = vmatmul.mubr.f32.gmra.mxu0 %v48
    %v281 = vpop.f32.mrf.mxu0
    %v282 = vadd.f32 0.0, %v281
    %v283 = vpop.f32.mrf.mxu0
    %284 = vdwg.mxu0
    %v285 = vld [vmem:[%s7] sm:$0xff]
    %v286 = vld [vmem:[%s7 + $0x8] sm:$0xff]
    %v287 = vld [vmem:[%s7 + $0x10] sm:$0xff]
    %v288 = vld [vmem:[%s7 + $0x18] sm:$0xff]
    %v289 = vld [vmem:[%s7 + $0x20] sm:$0xff]
    %v290 = vld [vmem:[%s7 + $0x28] sm:$0xff]
    %v291 = vld [vmem:[%s7 + $0x30] sm:$0xff]
    %v292 = vld [vmem:[%s7 + $0x38] sm:$0xff]
    %v293 = vld [vmem:[%s6] sm:$0xff]
    %v294 = vld [vmem:[%s6 + $0x8] sm:$0xff]
    %v295 = vld [vmem:[%s6 + $0x10] sm:$0xff]
    %v296 = vld [vmem:[%s6 + $0x18] sm:$0xff]
    %v297 = vld [vmem:[%s6 + $0x20] sm:$0xff]
    %v298 = vld [vmem:[%s6 + $0x28] sm:$0xff]
    %v299 = vld [vmem:[%s6 + $0x30] sm:$0xff]
    %v300 = vld [vmem:[%s6 + $0x38] sm:$0xff]
    %vm301 = vcmask 130048
    %v303 = vsel %vm301, %v293, 0
    %v306 = vsel %vm301, %v294, 0
    %v309 = vsel %vm301, %v295, 0
    %v312 = vsel %vm301, %v296, 0
    %v315 = vsel %vm301, %v297, 0
    %v318 = vsel %vm301, %v298, 0
    %v321 = vsel %vm301, %v299, 0
    %v324 = vsel %vm301, %v300, 0
    %326 = vmatprep.subr.mxu0 0.0
    %327 = vmatpush1.msra.mxu0 0.0
    %328 = vmatprep.subr.mxu0 0.0
    %329 = vmatpush1.msra.mxu0 0.0
    %330 = vmatprep.subr.mxu0 0.0
    %331 = vmatpush1.msra.mxu0 0.0
    %332 = vmatprep.subr.mxu0 0.0
    %333 = vmatpush1.msra.mxu0 0.0
    %334 = vmatprep.subr.mxu0 0.0
    %335 = vmatpush1.msra.mxu0 0.0
    %336 = vmatprep.subr.mxu0 0.0
    %337 = vmatpush1.msra.mxu0 0.0
    %338 = vmatprep.subr.mxu0 0.0
    %339 = vmatpush1.msra.mxu0 0.0
    %340 = vmatprep.subr.mxu0 0.0
    %341 = vmatpush1.msra.mxu0 0.0
    %342 = vmatprep.subr.mxu0 0.0
    %343 = vmatpush1.msra.mxu0 0.0
    %344 = vmatprep.subr.mxu0 0.0
    %345 = vmatpush1.msra.mxu0 0.0
    %346 = vmatprep.subr.mxu0 0.0
    %347 = vmatpush1.msra.mxu0 0.0
    %348 = vmatprep.subr.mxu0 0.0
    %349 = vmatpush1.msra.mxu0 0.0
    %350 = vmatprep.subr.mxu0 0.0
    %351 = vmatpush1.msra.mxu0 0.0
    %352 = vmatprep.subr.mxu0 0.0
    %353 = vmatpush1.msra.mxu0 0.0
    %354 = vmatprep.subr.mxu0 0.0
    %355 = vmatpush1.msra.mxu0 %v122
    %356 = vmatprep.subr.mxu0 0.0
    %357 = vmatpush1.msra.mxu0 %v117
    %358 = vmatprep.subr.mxu0 0.0
    %359 = vmatpush2.msra.mxu0 0.0
    %360 = vmatprep.subr.mxu0 0.0
    %361 = vmatpush2.msra.mxu0 0.0
    %362 = vmatprep.subr.mxu0 0.0
    %363 = vmatpush2.msra.mxu0 0.0
    %364 = vmatprep.subr.mxu0 0.0
    %365 = vmatpush2.msra.mxu0 0.0
    %366 = vmatprep.subr.mxu0 0.0
    %367 = vmatpush2.msra.mxu0 0.0
    %368 = vmatprep.subr.mxu0 0.0
    %369 = vmatpush2.msra.mxu0 0.0
    %370 = vmatprep.subr.mxu0 0.0
    %371 = vmatpush2.msra.mxu0 0.0
    %372 = vmatprep.subr.mxu0 0.0
    %373 = vmatpush2.msra.mxu0 0.0
    %374 = vmatprep.subr.mxu0 0.0
    %375 = vmatpush2.msra.mxu0 0.0
    %376 = vmatprep.subr.mxu0 0.0
    %377 = vmatpush2.msra.mxu0 0.0
    %378 = vmatprep.subr.mxu0 0.0
    %379 = vmatpush2.msra.mxu0 0.0
    %380 = vmatprep.subr.mxu0 0.0
    %381 = vmatpush2.msra.mxu0 0.0
    %382 = vmatprep.subr.mxu0 0.0
    %383 = vmatpush2.msra.mxu0 0.0
    %384 = vmatprep.subr.mxu0 0.0
    %385 = vmatpush2.msra.mxu0 0.0
    %386 = vmatprep.subr.mxu0 0.0
    %387 = vmatpush2.msra.mxu0 0.0
    %388 = vmatprep.subr.mxu0 0.0
    %389 = vmatpush2.msra.mxu0 0.0
    %390 = vmatprep.mubr.f32.mxu0 0.0
    %391 = vmatmul.mubr.f32.gmra.mxu0 %v303
    %v392 = vpop.f32.mrf.mxu0
    %v393 = vadd.f32 0.0, %v392
    %v394 = vpop.f32.mrf.mxu0
    %395 = vmatprep.mubr.f32.mxu0 0.0
    %396 = vmatmul.mubr.f32.gmra.mxu0 %v306
    %v397 = vpop.f32.mrf.mxu0
    %v398 = vadd.f32 0.0, %v397
    %v399 = vpop.f32.mrf.mxu0
    %400 = vmatprep.mubr.f32.mxu0 0.0
    %401 = vmatmul.mubr.f32.gmra.mxu0 %v309
    %v402 = vpop.f32.mrf.mxu0
    %v403 = vadd.f32 0.0, %v402
    %v404 = vpop.f32.mrf.mxu0
    %405 = vmatprep.mubr.f32.mxu0 0.0
    %406 = vmatmul.mubr.f32.gmra.mxu0 %v312
    %v407 = vpop.f32.mrf.mxu0
    %v408 = vadd.f32 0.0, %v407
    %v409 = vpop.f32.mrf.mxu0
    %410 = vmatprep.mubr.f32.mxu0 0.0
    %411 = vmatmul.mubr.f32.gmra.mxu0 %v315
    %v412 = vpop.f32.mrf.mxu0
    %v413 = vadd.f32 0.0, %v412
    %v414 = vpop.f32.mrf.mxu0
    %415 = vmatprep.mubr.f32.mxu0 0.0
    %416 = vmatmul.mubr.f32.gmra.mxu0 %v318
    %v417 = vpop.f32.mrf.mxu0
    %v418 = vadd.f32 0.0, %v417
    %v419 = vpop.f32.mrf.mxu0
    %420 = vmatprep.mubr.f32.mxu0 0.0
    %421 = vmatmul.mubr.f32.gmra.mxu0 %v321
    %v422 = vpop.f32.mrf.mxu0
    %v423 = vadd.f32 0.0, %v422
    %v424 = vpop.f32.mrf.mxu0
    %425 = vmatprep.mubr.f32.mxu0 0.0
    %426 = vmatmul.mubr.f32.gmra.mxu0 %v324
    %v427 = vpop.f32.mrf.mxu0
    %v428 = vadd.f32 0.0, %v427
    %v429 = vpop.f32.mrf.mxu0
    %430 = vdwg.mxu0
    %v431 = vmul.f32 %v393, %v285
    %v432 = vmul.f32 %v398, %v286
    %v433 = vmul.f32 %v403, %v287
    %v434 = vmul.f32 %v408, %v288
    %v435 = vmul.f32 %v413, %v289
    %v436 = vmul.f32 %v418, %v290
    %v437 = vmul.f32 %v423, %v291
    %v438 = vmul.f32 %v428, %v292
    %v439 = vld [vmem:[%s8] sm:$0xff]
    %v440 = vld [vmem:[%s8 + $0x8] sm:$0xff]
    %v441 = vld [vmem:[%s8 + $0x10] sm:$0xff]
    %v442 = vld [vmem:[%s8 + $0x18] sm:$0xff]
    %v443 = vld [vmem:[%s8 + $0x20] sm:$0xff]
    %v444 = vld [vmem:[%s8 + $0x28] sm:$0xff]
    %v445 = vld [vmem:[%s8 + $0x30] sm:$0xff]
    %v446 = vld [vmem:[%s8 + $0x38] sm:$0xff]
    %vm447 = vcmask 261120
    %v449 = vsel %vm447, %v431, 0
    %v452 = vsel %vm447, %v432, 0
    %v455 = vsel %vm447, %v433, 0
    %v458 = vsel %vm447, %v434, 0
    %v461 = vsel %vm447, %v435, 0
    %v464 = vsel %vm447, %v436, 0
    %v467 = vsel %vm447, %v437, 0
    %v470 = vsel %vm447, %v438, 0
    %v473 = vsel %vm447, %v197, 0
    %v476 = vsel %vm447, %v202, 0
    %478 = vmatprep.subr.mxu0 0.0
    %479 = vmatpush1.xpose.msra.mxu0 0.0
    %480 = vmatprep.subr.mxu0 0.0
    %481 = vmatpush1.xpose.msra.mxu0 0.0
    %482 = vmatprep.subr.mxu0 0.0
    %483 = vmatpush1.xpose.msra.mxu0 0.0
    %484 = vmatprep.subr.mxu0 0.0
    %485 = vmatpush1.xpose.msra.mxu0 0.0
    %486 = vmatprep.subr.mxu0 0.0
    %487 = vmatpush1.xpose.msra.mxu0 0.0
    %488 = vmatprep.subr.mxu0 0.0
    %489 = vmatpush1.xpose.msra.mxu0 0.0
    %490 = vmatprep.subr.mxu0 0.0
    %491 = vmatpush1.xpose.msra.mxu0 0.0
    %492 = vmatprep.subr.mxu0 0.0
    %493 = vmatpush1.xpose.msra.mxu0 0.0
    %494 = vmatprep.subr.mxu0 0.0
    %495 = vmatpush1.xpose.msra.mxu0 0.0
    %496 = vmatprep.subr.mxu0 0.0
    %497 = vmatpush1.xpose.msra.mxu0 0.0
    %498 = vmatprep.subr.mxu0 0.0
    %499 = vmatpush1.xpose.msra.mxu0 0.0
    %500 = vmatprep.subr.mxu0 0.0
    %501 = vmatpush1.xpose.msra.mxu0 0.0
    %502 = vmatprep.subr.mxu0 0.0
    %503 = vmatpush1.xpose.msra.mxu0 0.0
    %504 = vmatprep.subr.mxu0 0.0
    %505 = vmatpush1.xpose.msra.mxu0 0.0
    %506 = vmatprep.subr.mxu0 0.0
    %507 = vmatpush1.xpose.msra.mxu0 %v476
    %508 = vmatprep.subr.mxu0 0.0
    %509 = vmatpush1.xpose.msra.mxu0 %v473
    %510 = vmatprep.subr.mxu0 0.0
    %511 = vmatpush2.xpose.msra.mxu0 0.0
    %512 = vmatprep.subr.mxu0 0.0
    %513 = vmatpush2.xpose.msra.mxu0 0.0
    %514 = vmatprep.subr.mxu0 0.0
    %515 = vmatpush2.xpose.msra.mxu0 0.0
    %516 = vmatprep.subr.mxu0 0.0
    %517 = vmatpush2.xpose.msra.mxu0 0.0
    %518 = vmatprep.subr.mxu0 0.0
    %519 = vmatpush2.xpose.msra.mxu0 0.0
    %520 = vmatprep.subr.mxu0 0.0
    %521 = vmatpush2.xpose.msra.mxu0 0.0
    %522 = vmatprep.subr.mxu0 0.0
    %523 = vmatpush2.xpose.msra.mxu0 0.0
    %524 = vmatprep.subr.mxu0 0.0
    %525 = vmatpush2.xpose.msra.mxu0 0.0
    %526 = vmatprep.subr.mxu0 0.0
    %527 = vmatpush2.xpose.msra.mxu0 0.0
    %528 = vmatprep.subr.mxu0 0.0
    %529 = vmatpush2.xpose.msra.mxu0 0.0
    %530 = vmatprep.subr.mxu0 0.0
    %531 = vmatpush2.xpose.msra.mxu0 0.0
    %532 = vmatprep.subr.mxu0 0.0
    %533 = vmatpush2.xpose.msra.mxu0 0.0
    %534 = vmatprep.subr.mxu0 0.0
    %535 = vmatpush2.xpose.msra.mxu0 0.0
    %536 = vmatprep.subr.mxu0 0.0
    %537 = vmatpush2.xpose.msra.mxu0 0.0
    %538 = vmatprep.subr.mxu0 0.0
    %539 = vmatpush2.xpose.msra.mxu0 0.0
    %540 = vmatprep.subr.mxu0 0.0
    %541 = vmatpush2.xpose.msra.mxu0 0.0
    %542 = vmatprep.mubr.f32.mxu0 0.0
    %543 = vmatmul.mubr.f32.gmra.mxu0 %v449
    %v544 = vpop.f32.mrf.mxu0
    %v545 = vadd.f32 %v439, %v544
    %v546 = vpop.f32.mrf.mxu0
    %547 = vmatprep.mubr.f32.mxu0 0.0
    %548 = vmatmul.mubr.f32.gmra.mxu0 %v452
    %v549 = vpop.f32.mrf.mxu0
    %v550 = vadd.f32 %v440, %v549
    %v551 = vpop.f32.mrf.mxu0
    %552 = vmatprep.mubr.f32.mxu0 0.0
    %553 = vmatmul.mubr.f32.gmra.mxu0 %v455
    %v554 = vpop.f32.mrf.mxu0
    %v555 = vadd.f32 %v441, %v554
    %v556 = vpop.f32.mrf.mxu0
    %557 = vmatprep.mubr.f32.mxu0 0.0
    %558 = vmatmul.mubr.f32.gmra.mxu0 %v458
    %v559 = vpop.f32.mrf.mxu0
    %v560 = vadd.f32 %v442, %v559
    %v561 = vpop.f32.mrf.mxu0
    %562 = vmatprep.mubr.f32.mxu0 0.0
    %563 = vmatmul.mubr.f32.gmra.mxu0 %v461
    %v564 = vpop.f32.mrf.mxu0
    %v565 = vadd.f32 %v443, %v564
    %v566 = vpop.f32.mrf.mxu0
    %567 = vmatprep.mubr.f32.mxu0 0.0
    %568 = vmatmul.mubr.f32.gmra.mxu0 %v464
    %v569 = vpop.f32.mrf.mxu0
    %v570 = vadd.f32 %v444, %v569
    %v571 = vpop.f32.mrf.mxu0
    %572 = vmatprep.mubr.f32.mxu0 0.0
    %573 = vmatmul.mubr.f32.gmra.mxu0 %v467
    %v574 = vpop.f32.mrf.mxu0
    %v575 = vadd.f32 %v445, %v574
    %v576 = vpop.f32.mrf.mxu0
    %577 = vmatprep.mubr.f32.mxu0 0.0
    %578 = vmatmul.mubr.f32.gmra.mxu0 %v470
    %v579 = vpop.f32.mrf.mxu0
    %v580 = vadd.f32 %v446, %v579
    %v581 = vpop.f32.mrf.mxu0
    %582 = vdwg.mxu0
    %v583 = vsel %vm301, %v545, -inf
    %584 = vmax.xlane.f32.xlu0 %v583
    %v585 = vpop.xlane.xlu0 %584
    %v586 = vsel %vm301, %v550, -inf
    %587 = vmax.xlane.f32.xlu0 %v586
    %v588 = vpop.xlane.xlu0 %587
    %v589 = vsel %vm301, %v555, -inf
    %590 = vmax.xlane.f32.xlu0 %v589
    %v591 = vpop.xlane.xlu0 %590
    %v592 = vsel %vm301, %v560, -inf
    %593 = vmax.xlane.f32.xlu0 %v592
    %v594 = vpop.xlane.xlu0 %593
    %v595 = vsel %vm301, %v565, -inf
    %596 = vmax.xlane.f32.xlu0 %v595
    %v597 = vpop.xlane.xlu0 %596
    %v598 = vsel %vm301, %v570, -inf
    %599 = vmax.xlane.f32.xlu0 %v598
    %v600 = vpop.xlane.xlu0 %599
    %v601 = vsel %vm301, %v575, -inf
    %602 = vmax.xlane.f32.xlu0 %v601
    %v603 = vpop.xlane.xlu0 %602
    %v604 = vsel %vm301, %v580, -inf
    %605 = vmax.xlane.f32.xlu0 %v604
    %v606 = vpop.xlane.xlu0 %605
    %v607 = vsub.f32 %v545, %v585
    %v608 = vsub.f32 %v550, %v588
    %v609 = vsub.f32 %v555, %v591
    %v610 = vsub.f32 %v560, %v594
    %v611 = vsub.f32 %v565, %v597
    %v612 = vsub.f32 %v570, %v600
    %v613 = vsub.f32 %v575, %v603
    %v614 = vsub.f32 %v580, %v606
    %v615 = vmul.f32 %v607, 1.442695
    %v616 = vpow.pop %v615
    %v617 = vmul.f32 %v608, 1.442695
    %v618 = vpow.pop %v617
    %v619 = vmul.f32 %v609, 1.442695
    %v620 = vpow.pop %v619
    %v621 = vmul.f32 %v610, 1.442695
    %v622 = vpow.pop %v621
    %v623 = vmul.f32 %v611, 1.442695
    %v624 = vpow.pop %v623
    %v625 = vmul.f32 %v612, 1.442695
    %v626 = vpow.pop %v625
    %v627 = vmul.f32 %v613, 1.442695
    %v628 = vpow.pop %v627
    %v629 = vmul.f32 %v614, 1.442695
    %v630 = vpow.pop %v629
    %v631 = vsel %vm301, %v616, 0.0
    %632 = vadd.xlane.f32.xlu0 %v631
    %v633 = vpop.xlane.xlu0 %632
    %v634 = vsel %vm301, %v618, 0.0
    %635 = vadd.xlane.f32.xlu0 %v634
    %v636 = vpop.xlane.xlu0 %635
    %v637 = vsel %vm301, %v620, 0.0
    %638 = vadd.xlane.f32.xlu0 %v637
    %v639 = vpop.xlane.xlu0 %638
    %v640 = vsel %vm301, %v622, 0.0
    %641 = vadd.xlane.f32.xlu0 %v640
    %v642 = vpop.xlane.xlu0 %641
    %v643 = vsel %vm301, %v624, 0.0
    %644 = vadd.xlane.f32.xlu0 %v643
    %v645 = vpop.xlane.xlu0 %644
    %v646 = vsel %vm301, %v626, 0.0
    %647 = vadd.xlane.f32.xlu0 %v646
    %v648 = vpop.xlane.xlu0 %647
    %v649 = vsel %vm301, %v628, 0.0
    %650 = vadd.xlane.f32.xlu0 %v649
    %v651 = vpop.xlane.xlu0 %650
    %v652 = vsel %vm301, %v630, 0.0
    %653 = vadd.xlane.f32.xlu0 %v652
    %v654 = vpop.xlane.xlu0 %653
    %v655 = vrcp.pop %v633
    %v656 = vmul.f32 %v616, %v655
    %v657 = vrcp.pop %v636
    %v658 = vmul.f32 %v618, %v657
    %v659 = vrcp.pop %v639
    %v660 = vmul.f32 %v620, %v659
    %v661 = vrcp.pop %v642
    %v662 = vmul.f32 %v622, %v661
    %v663 = vrcp.pop %v645
    %v664 = vmul.f32 %v624, %v663
    %v665 = vrcp.pop %v648
    %v666 = vmul.f32 %v626, %v665
    %v667 = vrcp.pop %v651
    %v668 = vmul.f32 %v628, %v667
    %v669 = vrcp.pop %v654
    %v670 = vmul.f32 %v630, %v669
    %v672 = vsel %vm301, %v656, 0
    %v675 = vsel %vm301, %v658, 0
    %v678 = vsel %vm301, %v660, 0
    %v681 = vsel %vm301, %v662, 0
    %v684 = vsel %vm301, %v664, 0
    %v687 = vsel %vm301, %v666, 0
    %v690 = vsel %vm301, %v668, 0
    %v693 = vsel %vm301, %v670, 0
    %695 = vmatprep.subr.mxu0 0.0
    %696 = vmatpush1.msra.mxu0 0.0
    %697 = vmatprep.subr.mxu0 0.0
    %698 = vmatpush1.msra.mxu0 0.0
    %699 = vmatprep.subr.mxu0 0.0
    %700 = vmatpush1.msra.mxu0 0.0
    %701 = vmatprep.subr.mxu0 0.0
    %702 = vmatpush1.msra.mxu0 0.0
    %703 = vmatprep.subr.mxu0 0.0
    %704 = vmatpush1.msra.mxu0 0.0
    %705 = vmatprep.subr.mxu0 0.0
    %706 = vmatpush1.msra.mxu0 0.0
    %707 = vmatprep.subr.mxu0 0.0
    %708 = vmatpush1.msra.mxu0 0.0
    %709 = vmatprep.subr.mxu0 0.0
    %710 = vmatpush1.msra.mxu0 0.0
    %711 = vmatprep.subr.mxu0 0.0
    %712 = vmatpush1.msra.mxu0 0.0
    %713 = vmatprep.subr.mxu0 0.0
    %714 = vmatpush1.msra.mxu0 0.0
    %715 = vmatprep.subr.mxu0 0.0
    %716 = vmatpush1.msra.mxu0 0.0
    %717 = vmatprep.subr.mxu0 0.0
    %718 = vmatpush1.msra.mxu0 0.0
    %719 = vmatprep.subr.mxu0 0.0
    %720 = vmatpush1.msra.mxu0 0.0
    %721 = vmatprep.subr.mxu0 0.0
    %722 = vmatpush1.msra.mxu0 0.0
    %723 = vmatprep.subr.mxu0 0.0
    %724 = vmatpush1.msra.mxu0 %v282
    %725 = vmatprep.subr.mxu0 0.0
    %726 = vmatpush1.msra.mxu0 %v277
    %727 = vmatprep.subr.mxu0 0.0
    %728 = vmatpush2.msra.mxu0 0.0
    %729 = vmatprep.subr.mxu0 0.0
    %730 = vmatpush2.msra.mxu0 0.0
    %731 = vmatprep.subr.mxu0 0.0
    %732 = vmatpush2.msra.mxu0 0.0
    %733 = vmatprep.subr.mxu0 0.0
    %734 = vmatpush2.msra.mxu0 0.0
    %735 = vmatprep.subr.mxu0 0.0
    %736 = vmatpush2.msra.mxu0 0.0
    %737 = vmatprep.subr.mxu0 0.0
    %738 = vmatpush2.msra.mxu0 0.0
    %739 = vmatprep.subr.mxu0 0.0
    %740 = vmatpush2.msra.mxu0 0.0
    %741 = vmatprep.subr.mxu0 0.0
    %742 = vmatpush2.msra.mxu0 0.0
    %743 = vmatprep.subr.mxu0 0.0
    %744 = vmatpush2.msra.mxu0 0.0
    %745 = vmatprep.subr.mxu0 0.0
    %746 = vmatpush2.msra.mxu0 0.0
    %747 = vmatprep.subr.mxu0 0.0
    %748 = vmatpush2.msra.mxu0 0.0
    %749 = vmatprep.subr.mxu0 0.0
    %750 = vmatpush2.msra.mxu0 0.0
    %751 = vmatprep.subr.mxu0 0.0
    %752 = vmatpush2.msra.mxu0 0.0
    %753 = vmatprep.subr.mxu0 0.0
    %754 = vmatpush2.msra.mxu0 0.0
    %755 = vmatprep.subr.mxu0 0.0
    %756 = vmatpush2.msra.mxu0 0.0
    %757 = vmatprep.subr.mxu0 0.0
    %758 = vmatpush2.msra.mxu0 0.0
    %759 = vmatprep.mubr.f32.mxu0 0.0
    %760 = vmatmul.mubr.f32.gmra.mxu0 %v672
    %v761 = vpop.f32.mrf.mxu0
    %v762 = vadd.f32 0.0, %v761
    %v763 = vpop.f32.mrf.mxu0
    %764 = vmatprep.mubr.f32.mxu0 0.0
    %765 = vmatmul.mubr.f32.gmra.mxu0 %v675
    %v766 = vpop.f32.mrf.mxu0
    %v767 = vadd.f32 0.0, %v766
    %v768 = vpop.f32.mrf.mxu0
    %769 = vmatprep.mubr.f32.mxu0 0.0
    %770 = vmatmul.mubr.f32.gmra.mxu0 %v678
    %v771 = vpop.f32.mrf.mxu0
    %v772 = vadd.f32 0.0, %v771
    %v773 = vpop.f32.mrf.mxu0
    %774 = vmatprep.mubr.f32.mxu0 0.0
    %775 = vmatmul.mubr.f32.gmra.mxu0 %v681
    %v776 = vpop.f32.mrf.mxu0
    %v777 = vadd.f32 0.0, %v776
    %v778 = vpop.f32.mrf.mxu0
    %779 = vmatprep.mubr.f32.mxu0 0.0
    %780 = vmatmul.mubr.f32.gmra.mxu0 %v684
    %v781 = vpop.f32.mrf.mxu0
    %v782 = vadd.f32 0.0, %v781
    %v783 = vpop.f32.mrf.mxu0
    %784 = vmatprep.mubr.f32.mxu0 0.0
    %785 = vmatmul.mubr.f32.gmra.mxu0 %v687
    %v786 = vpop.f32.mrf.mxu0
    %v787 = vadd.f32 0.0, %v786
    %v788 = vpop.f32.mrf.mxu0
    %789 = vmatprep.mubr.f32.mxu0 0.0
    %790 = vmatmul.mubr.f32.gmra.mxu0 %v690
    %v791 = vpop.f32.mrf.mxu0
    %v792 = vadd.f32 0.0, %v791
    %v793 = vpop.f32.mrf.mxu0
    %794 = vmatprep.mubr.f32.mxu0 0.0
    %795 = vmatmul.mubr.f32.gmra.mxu0 %v693
    %v796 = vpop.f32.mrf.mxu0
    %v797 = vadd.f32 0.0, %v796
    %v798 = vpop.f32.mrf.mxu0
    %799 = vdwg.mxu0
    %v800 = vmul.f32 %v762, %v285
    %v801 = vmul.f32 %v767, %v286
    %v802 = vmul.f32 %v772, %v287
    %v803 = vmul.f32 %v777, %v288
    %v804 = vmul.f32 %v782, %v289
    %v805 = vmul.f32 %v787, %v290
    %v806 = vmul.f32 %v792, %v291
    %v807 = vmul.f32 %v797, %v292
    %v808 = vld [vmem:[%s9] sm:$0xff]
    %v809 = vld [vmem:[%s9 + $0x8] sm:$0xff]
    %vm810 = vcmask 523264
    %v812 = vsel %vm810, %v808, 0
    %v815 = vsel %vm810, %v809, 0
    %817 = vmatprep.subr.mxu0 0.0
    %818 = vmatpush1.msra.mxu0 0.0
    %819 = vmatprep.subr.mxu0 0.0
    %820 = vmatpush1.msra.mxu0 0.0
    %821 = vmatprep.subr.mxu0 0.0
    %822 = vmatpush1.msra.mxu0 0.0
    %823 = vmatprep.subr.mxu0 0.0
    %824 = vmatpush1.msra.mxu0 0.0
    %825 = vmatprep.subr.mxu0 0.0
    %826 = vmatpush1.msra.mxu0 0.0
    %827 = vmatprep.subr.mxu0 0.0
    %828 = vmatpush1.msra.mxu0 0.0
    %829 = vmatprep.subr.mxu0 0.0
    %830 = vmatpush1.msra.mxu0 0.0
    %831 = vmatprep.subr.mxu0 0.0
    %832 = vmatpush1.msra.mxu0 0.0
    %833 = vmatprep.subr.mxu0 0.0
    %834 = vmatpush1.msra.mxu0 %v807
    %835 = vmatprep.subr.mxu0 0.0
    %836 = vmatpush1.msra.mxu0 %v806
    %837 = vmatprep.subr.mxu0 0.0
    %838 = vmatpush1.msra.mxu0 %v805
    %839 = vmatprep.subr.mxu0 0.0
    %840 = vmatpush1.msra.mxu0 %v804
    %841 = vmatprep.subr.mxu0 0.0
    %842 = vmatpush1.msra.mxu0 %v803
    %843 = vmatprep.subr.mxu0 0.0
    %844 = vmatpush1.msra.mxu0 %v802
    %845 = vmatprep.subr.mxu0 0.0
    %846 = vmatpush1.msra.mxu0 %v801
    %847 = vmatprep.subr.mxu0 0.0
    %848 = vmatpush1.msra.mxu0 %v800
    %849 = vmatprep.subr.mxu0 0.0
    %850 = vmatpush2.msra.mxu0 0.0
    %851 = vmatprep.subr.mxu0 0.0
    %852 = vmatpush2.msra.mxu0 0.0
    %853 = vmatprep.subr.mxu0 0.0
    %854 = vmatpush2.msra.mxu0 0.0
    %855 = vmatprep.subr.mxu0 0.0
    %856 = vmatpush2.msra.mxu0 0.0
    %857 = vmatprep.subr.mxu0 0.0
    %858 = vmatpush2.msra.mxu0 0.0
    %859 = vmatprep.subr.mxu0 0.0
    %860 = vmatpush2.msra.mxu0 0.0
    %861 = vmatprep.subr.mxu0 0.0
    %862 = vmatpush2.msra.mxu0 0.0
    %863 = vmatprep.subr.mxu0 0.0
    %864 = vmatpush2.msra.mxu0 0.0
    %865 = vmatprep.subr.mxu0 0.0
    %866 = vmatpush2.msra.mxu0 0.0
    %867 = vmatprep.subr.mxu0 0.0
    %868 = vmatpush2.msra.mxu0 0.0
    %869 = vmatprep.subr.mxu0 0.0
    %870 = vmatpush2.msra.mxu0 0.0
    %871 = vmatprep.subr.mxu0 0.0
    %872 = vmatpush2.msra.mxu0 0.0
    %873 = vmatprep.subr.mxu0 0.0
    %874 = vmatpush2.msra.mxu0 0.0
    %875 = vmatprep.subr.mxu0 0.0
    %876 = vmatpush2.msra.mxu0 0.0
    %877 = vmatprep.subr.mxu0 0.0
    %878 = vmatpush2.msra.mxu0 0.0
    %879 = vmatprep.subr.mxu0 0.0
    %880 = vmatpush2.msra.mxu0 0.0
    %881 = vmatprep.mubr.f32.mxu0 0.0
    %882 = vmatmul.mubr.f32.gmra.mxu0 %v812
    %v883 = vpop.f32.mrf.mxu0
    %v884 = vadd.f32 0.0, %v883
    %v885 = vpop.f32.mrf.mxu0
    %886 = vmatprep.mubr.f32.mxu0 0.0
    %887 = vmatmul.mubr.f32.gmra.mxu0 %v815
    %v888 = vpop.f32.mrf.mxu0
    %v889 = vadd.f32 0.0, %v888
    %v890 = vpop.f32.mrf.mxu0
    %891 = vdwg.mxu0
    %v892 = vld [vmem:[%s4] sm:$0xff]
    %v893 = vld [vmem:[%s4 + $0x8] sm:$0xff]
    %v894 = vld [vmem:[%s4 + $0x10] sm:$0xff]
    %v895 = vld [vmem:[%s4 + $0x18] sm:$0xff]
    %v896 = vld [vmem:[%s5] sm:$0x1]
    %v898 = vlaneseq
    %v899 = vshrl.u32 %v898, 7
    %v900 = vsub.s32 0, %v899
    %v901 = vrot.slane %v896, %v900
    %v904 = vsel %vm447, %v884, 0
    %v907 = vsel %vm447, %v889, 0
    %909 = vmatprep.subr.mxu0 0.0
    %910 = vmatpush1.msra.mxu0 0.0
    %911 = vmatprep.subr.mxu0 0.0
    %912 = vmatpush1.msra.mxu0 0.0
    %913 = vmatprep.subr.mxu0 0.0
    %914 = vmatpush1.msra.mxu0 0.0
    %915 = vmatprep.subr.mxu0 0.0
    %916 = vmatpush1.msra.mxu0 0.0
    %917 = vmatprep.subr.mxu0 0.0
    %918 = vmatpush1.msra.mxu0 0.0
    %919 = vmatprep.subr.mxu0 0.0
    %920 = vmatpush1.msra.mxu0 0.0
    %921 = vmatprep.subr.mxu0 0.0
    %922 = vmatpush1.msra.mxu0 0.0
    %923 = vmatprep.subr.mxu0 0.0
    %924 = vmatpush1.msra.mxu0 0.0
    %925 = vmatprep.subr.mxu0 0.0
    %926 = vmatpush1.msra.mxu0 0.0
    %927 = vmatprep.subr.mxu0 0.0
    %928 = vmatpush1.msra.mxu0 0.0
    %929 = vmatprep.subr.mxu0 0.0
    %930 = vmatpush1.msra.mxu0 0.0
    %931 = vmatprep.subr.mxu0 0.0
    %932 = vmatpush1.msra.mxu0 0.0
    %933 = vmatprep.subr.mxu0 0.0
    %934 = vmatpush1.msra.mxu0 %v895
    %935 = vmatprep.subr.mxu0 0.0
    %936 = vmatpush1.msra.mxu0 %v894
    %937 = vmatprep.subr.mxu0 0.0
    %938 = vmatpush1.msra.mxu0 %v893
    %939 = vmatprep.subr.mxu0 0.0
    %940 = vmatpush1.msra.mxu0 %v892
    %941 = vmatprep.subr.mxu0 0.0
    %942 = vmatpush2.msra.mxu0 0.0
    %943 = vmatprep.subr.mxu0 0.0
    %944 = vmatpush2.msra.mxu0 0.0
    %945 = vmatprep.subr.mxu0 0.0
    %946 = vmatpush2.msra.mxu0 0.0
    %947 = vmatprep.subr.mxu0 0.0
    %948 = vmatpush2.msra.mxu0 0.0
    %949 = vmatprep.subr.mxu0 0.0
    %950 = vmatpush2.msra.mxu0 0.0
    %951 = vmatprep.subr.mxu0 0.0
    %952 = vmatpush2.msra.mxu0 0.0
    %953 = vmatprep.subr.mxu0 0.0
    %954 = vmatpush2.msra.mxu0 0.0
    %955 = vmatprep.subr.mxu0 0.0
    %956 = vmatpush2.msra.mxu0 0.0
    %957 = vmatprep.subr.mxu0 0.0
    %958 = vmatpush2.msra.mxu0 0.0
    %959 = vmatprep.subr.mxu0 0.0
    %960 = vmatpush2.msra.mxu0 0.0
    %961 = vmatprep.subr.mxu0 0.0
    %962 = vmatpush2.msra.mxu0 0.0
    %963 = vmatprep.subr.mxu0 0.0
    %964 = vmatpush2.msra.mxu0 0.0
    %965 = vmatprep.subr.mxu0 0.0
    %966 = vmatpush2.msra.mxu0 0.0
    %967 = vmatprep.subr.mxu0 0.0
    %968 = vmatpush2.msra.mxu0 0.0
    %969 = vmatprep.subr.mxu0 0.0
    %970 = vmatpush2.msra.mxu0 0.0
    %971 = vmatprep.subr.mxu0 0.0
    %972 = vmatpush2.msra.mxu0 0.0
    %973 = vmatprep.mubr.f32.mxu0 0.0
    %974 = vmatmul.mubr.f32.gmra.mxu0 %v904
    %v975 = vpop.f32.mrf.mxu0
    %v976 = vadd.f32 %v901, %v975
    %v977 = vpop.f32.mrf.mxu0
    %978 = vmatprep.mubr.f32.mxu0 0.0
    %979 = vmatmul.mubr.f32.gmra.mxu0 %v907
    %v980 = vpop.f32.mrf.mxu0
    %v981 = vadd.f32 %v901, %v980
    %v982 = vpop.f32.mrf.mxu0
    %983 = vdwg.mxu0
    %984 = vst.msk [vmem:[#allocation2] sm:$0xff] %vm447, %v976
    %985 = vst.msk [vmem:[#allocation2 + $0x8] sm:$0xff] %vm447, %v981
    // Predicated region
    $region42: #{tpu_custom_call.1} parent=1 // pred_check
      _
    $region43: #{tpu_custom_call.1} parent=1 // pred_check_branch
      %987 = sbr.rel (0) target = $region45
    $region44: #{tpu_custom_call.1} parent=1 // pred_region
      %s989 = ssub.s32 256, 256
      %990 = vsyncadd [#allocation3], %s989
      %s991 = sshll.u32 [#allocation2], 4
      %s992 = int_to_ptr.vmem [resolvable:$true] %s991
      %997 = dma.vmem_to_hbm [thread:$0]  %s992, 256, %s10, [#allocation3], 128, 128, 8
    $region45: #{tpu_custom_call.1} parent=1 // pred_fallthru
      _
    // Predicated region
    $region46: #{tpu_custom_call.1} parent=1 // pred_check
      _
    $region47: #{tpu_custom_call.1} parent=1 // pred_check_branch
      %999 = sbr.rel (0) target = $region49
    $region48: #{tpu_custom_call.1} parent=1 // pred_region
      %1000 = dma.done [#allocation3], 256
    $region49: #{tpu_custom_call.1} parent=1 // pred_fallthru
      _
    %1001 = vsyncpa [#allocation3], 1

</llo_original>
